<compile_context>
chip_gen: v7x
topology: tpu7x:2x2x1
jax: 0.10.0
libtpu: 0.0.40
codegen_flags: <defaults>
</compile_context>

<pallas_src>
import math
from functools import partial

import jax
import jax.numpy as jnp
from jax.experimental import pallas as pl
from jax.experimental.pallas import tpu as pltpu


def _round_up(n, m):
    return ((n + m - 1) // m) * m


def _cdiv(a, b):
    return -(-a // b)


def actor_kernel(x_ref, w1_ref, w2_ref, wh_ref, bias_ref, out_ref, *, action_dim):
    """One batch tile of the fused actor MLP.

    x_ref    : [TB, S]         f32   (raw input rows; cast to bf16 in-kernel)
    w1_ref   : [S, H_pad]      bf16
    w2_ref   : [H_pad, H_pad]  bf16
    wh_ref   : [H_pad, P]      bf16  (fused mean||log_std head, zero padded)
    bias_ref : [3, W]          f32   (rows: b1, b2, bh; zero padded)
    out_ref  : [TB, P]         bf16  (lanes [0,A)=mean, [A,2A)=std)
    """
    h_pad = w1_ref.shape[1]
    p = out_ref.shape[1]

    # In-kernel cast: avoids a separate wrapper pad/cast pass over HBM.
    x = x_ref[...].astype(jnp.bfloat16)

    # fc1 + relu  (bf16 MXU matmul, f32 accumulate)
    b1 = bias_ref[0:1, 0:h_pad]
    h1 = jnp.dot(x, w1_ref[...], preferred_element_type=jnp.float32) + b1
    h1 = jnp.maximum(h1, 0.0).astype(jnp.bfloat16)

    # fc2 + relu
    b2 = bias_ref[1:2, 0:h_pad]
    h2 = jnp.dot(h1, w2_ref[...], preferred_element_type=jnp.float32) + b2
    h2 = jnp.maximum(h2, 0.0).astype(jnp.bfloat16)

    # fused heads: single matmul, then tanh on mean lanes / exp on std lanes.
    bh = bias_ref[2:3, 0:p]
    y = jnp.dot(h2, wh_ref[...], preferred_element_type=jnp.float32) + bh

    # (1, P) lane mask broadcast by where -> no TB x P int32 tile materialized.
    lane = jax.lax.broadcasted_iota(jnp.int32, (1, p), 1)
    is_mean = lane < action_dim
    mean_part = jnp.tanh(y)
    # Zero mean-lane logits before exp so large pre-tanh values never hit exp.
    std_part = jnp.exp(jnp.where(is_mean, 0.0, y))
    # padded lanes (>= 2A) carry y == 0 exactly -> exp(0)=1, sliced off outside.
    out_ref[...] = jnp.where(is_mean, mean_part, std_part).astype(out_ref.dtype)


def prepare_params(p, state_dim, hidden_dim, action_dim):
    """Fuse heads, pad output dims to 128, pack biases, cast weights to bf16.

    Done once; weights stay resident in VMEM across batch tiles.
    Only the *output* dims are padded (MXU handles arbitrary K), so no input
    padding is ever required at call time.
    """
    h_pad = _round_up(hidden_dim, 128)
    out_pad = _round_up(2 * action_dim, 128)

    def pad_cols(w, cols):
        return jnp.pad(w, ((0, 0), (0, cols - w.shape[1])))

    w1 = pad_cols(p["w1"], h_pad).astype(jnp.bfloat16)                 # [S, H_pad]
    w2 = jnp.pad(p["w2"], ((0, h_pad - hidden_dim),
                           (0, h_pad - hidden_dim))).astype(jnp.bfloat16)
    wh = jnp.pad(jnp.concatenate([p["w3"], p["wls"]], axis=1),
                 ((0, h_pad - hidden_dim),
                  (0, out_pad - 2 * action_dim))).astype(jnp.bfloat16)  # [H_pad, P]

    w_width = max(h_pad, out_pad)
    bias = jnp.zeros((3, w_width), jnp.float32)
    bias = bias.at[0, :hidden_dim].set(p["b1"][0])
    bias = bias.at[1, :hidden_dim].set(p["b2"][0])
    bias = bias.at[2, :action_dim].set(p["b3"][0])
    bias = bias.at[2, action_dim:2 * action_dim].set(p["bls"][0])

    return dict(w1=w1, w2=w2, wh=wh, bias=bias,
                h_pad=h_pad, out_pad=out_pad)


def _choose_batch_tiling(batch, batch_tile):
    """Pick (tb, b_pad, n_tiles): multiple-of-16 tiles, no near-empty tail,
    and >= 2 grid steps for large batches so v7x's two TCs both get work
    (extra grid step costs ~0.35us on 1-TC chips -> negligible)."""
    b16 = _round_up(batch, 16)
    n_tiles = _cdiv(b16, batch_tile)
    if b16 >= 256:
        n_tiles = max(n_tiles, 2)
    tb = _round_up(_cdiv(b16, n_tiles), 16)
    b_pad = n_tiles * tb
    return tb, b_pad, n_tiles


def actor_forward(x, prep, action_dim, *, batch_tile=1024):
    """x: [B, state_dim] f32. Returns (mean, std), each [B, action_dim] f32.

    batch_tile: 1024 default (HBM/overhead-bound regime); keep 256-512 on v5e
    if profiling shows the vector-store slot saturating.
    """
    B, state_dim = x.shape
    h_pad, out_pad = prep["h_pad"], prep["out_pad"]

    tb, b_pad, n_tiles = _choose_batch_tiling(B, batch_tile)
    grid = (n_tiles,)

    # Only batch-row padding in the wrapper (cheap); lanes/cast handled in-kernel.
    x_p = x if b_pad == B else jnp.pad(x, ((0, b_pad - B), (0, 0)))

    # Weights use a constant index_map -> fetched once, resident across tiles.
    # (If hidden_dim is ever scaled to multi-K sizes, add
    #  pipeline_mode=pl.Buffered(1) on the weight specs and set
    #  vmem_limit_bytes explicitly; irrelevant at h_pad<=256.)
    out = pl.pallas_call(
        partial(actor_kernel, action_dim=action_dim),
        out_shape=jax.ShapeDtypeStruct((b_pad, out_pad), jnp.bfloat16),
        grid=grid,
        in_specs=[
            pl.BlockSpec((tb, state_dim), lambda i: (i, 0)),        # x: batch-tiled
            pl.BlockSpec((state_dim, h_pad), lambda i: (0, 0)),     # W1: resident
            pl.BlockSpec((h_pad, h_pad), lambda i: (0, 0)),         # W2: resident
            pl.BlockSpec((h_pad, out_pad), lambda i: (0, 0)),       # fused head W
            pl.BlockSpec(prep["bias"].shape, lambda i: (0, 0)),     # packed biases
        ],
        out_specs=pl.BlockSpec((tb, out_pad), lambda i: (i, 0)),
        compiler_params=pltpu.CompilerParams(
            dimension_semantics=("parallel",)),
    )(x_p, prep["w1"], prep["w2"], prep["wh"], prep["bias"])

    mean = out[:B, :action_dim].astype(jnp.float32)
    std = out[:B, action_dim:2 * action_dim].astype(jnp.float32)
    return mean, std


def init_params(key, state_dim, action_dim, hidden_dim):
    """PyTorch nn.Linear default init (uniform +/- 1/sqrt(fan_in)).
    Weights stored [in, out]; biases [1, out]. Logical f32 params."""
    def linear(k, fan_in, fan_out):
        kw, kb = jax.random.split(k)
        bound = 1.0 / math.sqrt(fan_in)
        w = jax.random.uniform(kw, (fan_in, fan_out), jnp.float32, -bound, bound)
        b = jax.random.uniform(kb, (1, fan_out), jnp.float32, -bound, bound)
        return w, b

    k1, k2, k3, k4 = jax.random.split(key, 4)
    w1, b1 = linear(k1, state_dim, hidden_dim)
    w2, b2 = linear(k2, hidden_dim, hidden_dim)
    w3, b3 = linear(k3, hidden_dim, action_dim)
    wls, bls = linear(k4, hidden_dim, action_dim)
    return dict(w1=w1, b1=b1, w2=w2, b2=b2, w3=w3, b3=b3, wls=wls, bls=bls)


def actor_ref(x, p):
    """Pure-JAX f32 reference."""
    h1 = jnp.maximum(x @ p["w1"] + p["b1"], 0.0)
    h2 = jnp.maximum(h1 @ p["w2"] + p["b2"], 0.0)
    mean = jnp.tanh(h2 @ p["w3"] + p["b3"])
    std = jnp.exp(h2 @ p["wls"] + p["bls"])
    return mean, std


if __name__ == "__main__":
    # Small stand-ins for mujoco-derived dims (model.nq+nv+3 / model.nu).
    # TODO(synk): real state_dim/action_dim come from a mujoco XML; not loadable here.
    state_dim, action_dim, hidden_dim, batch = 32, 8, 32, 2

    key = jax.random.PRNGKey(0)
    kx, kp = jax.random.split(key)
    x = jax.random.normal(kx, (batch, state_dim), jnp.float32)
    params = init_params(kp, state_dim, action_dim, hidden_dim)

    prep = prepare_params(params, state_dim, hidden_dim, action_dim)
    mean, std = jax.block_until_ready(actor_forward(x, prep, action_dim))
    mean_ref, std_ref = actor_ref(x, params)

    assert mean.shape == (batch, action_dim) and std.shape == (batch, action_dim)
    # bf16 matmuls + bf16 output slab -> loosen tolerance vs the f32 reference.
    assert jnp.allclose(mean, mean_ref, atol=3e-2, rtol=3e-2), "mean mismatch"
    assert jnp.allclose(std, std_ref, atol=3e-2, rtol=3e-2), "std mismatch"

    print("KERNEL_OK")
</pallas_src>

<mosaic_0001>
module attributes {stable_mosaic.version = 11 : i64} {
  func.func @actor_kernel(%arg0: i32, %arg1: memref<16x32xf32, #tpu.memory_space<vmem>>, %arg2: memref<32x128xbf16, #tpu.memory_space<vmem>>, %arg3: memref<128x128xbf16, #tpu.memory_space<vmem>>, %arg4: memref<128x128xbf16, #tpu.memory_space<vmem>>, %arg5: memref<3x128xf32, #tpu.memory_space<vmem>>, %arg6: memref<16x128xbf16, #tpu.memory_space<vmem>>) attributes {dimension_semantics = [#tpu.dimension_semantics<parallel>], iteration_bounds = array<i64: 1>, scalar_prefetch = 0 : i64, scratch_operands = 0 : i64, tpu.core_type = #tpu.core_type<tc>, window_params = [{transform_indices = @transform_0, window_bounds = array<i64: 16, 32>}, {pipeline_mode = #tpu.pipeline_mode<synchronous>, transform_indices = @transform_1, window_bounds = array<i64: 32, 128>}, {pipeline_mode = #tpu.pipeline_mode<synchronous>, transform_indices = @transform_2, window_bounds = array<i64: 128, 128>}, {pipeline_mode = #tpu.pipeline_mode<synchronous>, transform_indices = @transform_3, window_bounds = array<i64: 128, 128>}, {pipeline_mode = #tpu.pipeline_mode<synchronous>, transform_indices = @transform_4, window_bounds = array<i64: 3, 128>}, {transform_indices = @transform_5, window_bounds = array<i64: 16, 128>}]} {
    %c0 = arith.constant 0 : index
    %c0_0 = arith.constant 0 : index
    %0 = vector.load %arg1[%c0, %c0_0] : memref<16x32xf32, #tpu.memory_space<vmem>>, vector<16x32xf32>
    %1 = arith.truncf %0 : vector<16x32xf32> to vector<16x32xbf16>
    %c0_1 = arith.constant 0 : index
    %c0_2 = arith.constant 0 : index
    %2 = vector.load %arg5[%c0_1, %c0_2] : memref<3x128xf32, #tpu.memory_space<vmem>>, vector<1x128xf32>
    %c0_3 = arith.constant 0 : index
    %c0_4 = arith.constant 0 : index
    %3 = vector.load %arg2[%c0_3, %c0_4] : memref<32x128xbf16, #tpu.memory_space<vmem>>, vector<32x128xbf16>
    %cst = arith.constant dense<0.000000e+00> : vector<16x128xf32>
    %4 = tpu.matmul %1, %3, %cst {dimension_numbers = #tpu.dot_dimension_numbers<[1], [0], [0], [1], [0, 0, 1, 1], [], []>} : vector<16x32xbf16>, vector<32x128xbf16>, vector<16x128xf32> -> vector<16x128xf32>
    %5 = vector.broadcast %2 : vector<1x128xf32> to vector<16x128xf32>
    %6 = arith.addf %4, %5 : vector<16x128xf32>
    %cst_5 = arith.constant 0.000000e+00 : f32
    %7 = vector.broadcast %cst_5 : f32 to vector<16x128xf32>
    %8 = arith.maximumf %6, %7 : vector<16x128xf32>
    %9 = arith.truncf %8 : vector<16x128xf32> to vector<16x128xbf16>
    %c1 = arith.constant 1 : index
    %c0_6 = arith.constant 0 : index
    %10 = vector.load %arg5[%c1, %c0_6] : memref<3x128xf32, #tpu.memory_space<vmem>>, vector<1x128xf32>
    %c0_7 = arith.constant 0 : index
    %c0_8 = arith.constant 0 : index
    %11 = vector.load %arg3[%c0_7, %c0_8] : memref<128x128xbf16, #tpu.memory_space<vmem>>, vector<128x128xbf16>
    %cst_9 = arith.constant dense<0.000000e+00> : vector<16x128xf32>
    %12 = tpu.matmul %9, %11, %cst_9 {dimension_numbers = #tpu.dot_dimension_numbers<[1], [0], [0], [1], [0, 0, 1, 1], [], []>} : vector<16x128xbf16>, vector<128x128xbf16>, vector<16x128xf32> -> vector<16x128xf32>
    %13 = vector.broadcast %10 : vector<1x128xf32> to vector<16x128xf32>
    %14 = arith.addf %12, %13 : vector<16x128xf32>
    %cst_10 = arith.constant 0.000000e+00 : f32
    %15 = vector.broadcast %cst_10 : f32 to vector<16x128xf32>
    %16 = arith.maximumf %14, %15 : vector<16x128xf32>
    %17 = arith.truncf %16 : vector<16x128xf32> to vector<16x128xbf16>
    %c2 = arith.constant 2 : index
    %c0_11 = arith.constant 0 : index
    %18 = vector.load %arg5[%c2, %c0_11] : memref<3x128xf32, #tpu.memory_space<vmem>>, vector<1x128xf32>
    %c0_12 = arith.constant 0 : index
    %c0_13 = arith.constant 0 : index
    %19 = vector.load %arg4[%c0_12, %c0_13] : memref<128x128xbf16, #tpu.memory_space<vmem>>, vector<128x128xbf16>
    %cst_14 = arith.constant dense<0.000000e+00> : vector<16x128xf32>
    %20 = tpu.matmul %17, %19, %cst_14 {dimension_numbers = #tpu.dot_dimension_numbers<[1], [0], [0], [1], [0, 0, 1, 1], [], []>} : vector<16x128xbf16>, vector<128x128xbf16>, vector<16x128xf32> -> vector<16x128xf32>
    %21 = vector.broadcast %18 : vector<1x128xf32> to vector<16x128xf32>
    %22 = arith.addf %20, %21 : vector<16x128xf32>
    %23 = tpu.iota {dimensions = array<i32: 1>} : vector<1x128xi32>
    %c8_i32 = arith.constant 8 : i32
    %24 = vector.broadcast %c8_i32 : i32 to vector<1x128xi32>
    %25 = arith.cmpi slt, %23, %24 : vector<1x128xi32>
    %26 = math.tanh %22 : vector<16x128xf32>
    %cst_15 = arith.constant 0.000000e+00 : f32
    %27 = vector.shape_cast %25 : vector<1x128xi1> to vector<1x128xi1>
    %28 = vector.broadcast %27 : vector<1x128xi1> to vector<16x128xi1>
    %29 = vector.broadcast %cst_15 : f32 to vector<16x128xf32>
    %30 = arith.select %28, %29, %22 : vector<16x128xi1>, vector<16x128xf32>
    %31 = math.exp %30 : vector<16x128xf32>
    %32 = vector.shape_cast %25 : vector<1x128xi1> to vector<1x128xi1>
    %33 = vector.broadcast %32 : vector<1x128xi1> to vector<16x128xi1>
    %34 = arith.select %33, %26, %31 : vector<16x128xi1>, vector<16x128xf32>
    %35 = arith.truncf %34 : vector<16x128xf32> to vector<16x128xbf16>
    %c0_16 = arith.constant 0 : index
    %c0_17 = arith.constant 0 : index
    %36 = vector.load %arg6[%c0_16, %c0_17] : memref<16x128xbf16, #tpu.memory_space<vmem>>, vector<16x128xbf16>
    tpu.vector_store %arg6[%c0_16, %c0_17], %35 {strides = array<i32>} : memref<16x128xbf16, #tpu.memory_space<vmem>>, vector<16x128xbf16>,
    return
  }
  func.func @transform_0(%arg0: i32) -> (i32, i32) {
    %c0_i32 = arith.constant 0 : i32
    %c0_i32_0 = arith.constant 0 : i32
    return %arg0, %c0_i32 : i32, i32
  }
  func.func @transform_1(%arg0: i32) -> (i32, i32) {
    %c0_i32 = arith.constant 0 : i32
    %c0_i32_0 = arith.constant 0 : i32
    %c0_i32_1 = arith.constant 0 : i32
    return %c0_i32, %c0_i32_0 : i32, i32
  }
  func.func @transform_2(%arg0: i32) -> (i32, i32) {
    %c0_i32 = arith.constant 0 : i32
    %c0_i32_0 = arith.constant 0 : i32
    %c0_i32_1 = arith.constant 0 : i32
    return %c0_i32, %c0_i32_0 : i32, i32
  }
  func.func @transform_3(%arg0: i32) -> (i32, i32) {
    %c0_i32 = arith.constant 0 : i32
    %c0_i32_0 = arith.constant 0 : i32
    %c0_i32_1 = arith.constant 0 : i32
    return %c0_i32, %c0_i32_0 : i32, i32
  }
  func.func @transform_4(%arg0: i32) -> (i32, i32) {
    %c0_i32 = arith.constant 0 : i32
    %c0_i32_0 = arith.constant 0 : i32
    %c0_i32_1 = arith.constant 0 : i32
    return %c0_i32, %c0_i32_0 : i32, i32
  }
  func.func @transform_5(%arg0: i32) -> (i32, i32) {
    %c0_i32 = arith.constant 0 : i32
    %c0_i32_0 = arith.constant 0 : i32
    return %arg0, %c0_i32 : i32, i32
  }
}

</mosaic_0001>

<llo_original>
// kernel: tpu_custom_call.1
$region0: #{tpu_custom_call.1}
  #allocation0 [shape = 'u32[]', space=smem, size = 0x4, offset = 0x4, fixed_abs, tag = 'smem constant byte address 0x4 - core index']
  #allocation1 [shape = 'u32[144,128]{1,0:T(1,128)}', space=vmem, size = 0x12000, scoped, tag = 'internal scratch']
  %s0 = inlined_call_operand.hbm [shape: f32[16,32], index: 0, kind: input, shape index: {}]
  %s1 = inlined_call_operand.hbm [shape: bf16[32,128], index: 1, kind: input, shape index: {}]
  %s2 = inlined_call_operand.hbm [shape: bf16[128,128], index: 2, kind: input, shape index: {}]
  %s3 = inlined_call_operand.hbm [shape: bf16[128,128], index: 3, kind: input, shape index: {}]
  %s4 = inlined_call_operand.vmem [shape: f32[3,128], index: 4, kind: input, shape index: {}]
  %s5 = inlined_call_operand.hbm [shape: bf16[16,128], index: 5, kind: output, shape index: {}]
  %s6 = sld [smem:[#allocation0]]
  $region46: #{tpu_custom_call.1} parent=0
    _
  %s8 = ssub.s32 1, %s6
  %s9 = scalar_select 0, %s8, %s6
  $region1: #{tpu_custom_call.1} parent=0
    #allocation2 [shape = 'u8[8192]{0}', space=vmem, size = 0x2000, scoped, tag = 'input window, operand 0, single buffered']
    #allocation3 [shape = 's32[1]{0}', space=sflag, size = 0x4, scoped, tag = 'scoped memory for tpu_custom_call.1']
    #allocation4 [shape = 's32[1]{0}', space=sflag, size = 0x4, scoped, tag = 'scoped memory for tpu_custom_call.1']
    #allocation5 [shape = 'u8[8192]{0}', space=vmem, size = 0x2000, scoped, tag = 'input window, operand 1, single buffered']
    #allocation6 [shape = 's32[1]{0}', space=sflag, size = 0x4, scoped, tag = 'scoped memory for tpu_custom_call.1']
    #allocation7 [shape = 'u8[32768]{0}', space=vmem, size = 0x8000, scoped, tag = 'input window, operand 2, single buffered']
    #allocation8 [shape = 'u8[32768]{0}', space=vmem, size = 0x8000, scoped, tag = 'input window, operand 3, single buffered']
    #allocation9 [shape = 's32[1]{0}', space=sflag, size = 0x4, scoped, tag = 'scoped memory for tpu_custom_call.1']
    #allocation10 [shape = 'u8[4096]{0}', space=vmem, size = 0x1000, scoped, tag = 'output window, operand 0, single buffered']
    %10 = vsyncpa [#allocation3], 0
    %11 = vsyncpa [#allocation6], 0
    %12 = vsyncpa [#allocation9], 0
    %13 = vsyncpa [#allocation4], 0
    // Predicated region
    $region2: #{tpu_custom_call.1} parent=1 // pred_check
      _
    $region3: #{tpu_custom_call.1} parent=1 // pred_check_branch
      %15 = sbr.rel (0) target = $region5
    $region4: #{tpu_custom_call.1} parent=1 // pred_region
      %s17 = ssub.s32 256, 256
      %18 = vsyncadd [#allocation3], %s17
      %s19 = sshll.u32 [#allocation2], 4
      %s20 = int_to_ptr.vmem [resolvable:$true] %s19
      %25 = dma.hbm_to_vmem [thread:$0]  %s0, 256, %s20, [#allocation3], 128, 128, 8
    $region5: #{tpu_custom_call.1} parent=1 // pred_fallthru
      _
    // Predicated region
    $region6: #{tpu_custom_call.1} parent=1 // pred_check
      _
    $region7: #{tpu_custom_call.1} parent=1 // pred_check_branch
      %27 = sbr.rel (0) target = $region9
    $region8: #{tpu_custom_call.1} parent=1 // pred_region
      %s29 = ssub.s32 256, 256
      %30 = vsyncadd [#allocation6], %s29
      %s31 = sshll.u32 [#allocation5], 4
      %s32 = int_to_ptr.vmem [resolvable:$true] %s31
      %37 = dma.hbm_to_vmem [thread:$0]  %s1, 256, %s32, [#allocation6], 64, 64, 4
    $region9: #{tpu_custom_call.1} parent=1 // pred_fallthru
      _
    // Predicated region
    $region10: #{tpu_custom_call.1} parent=1 // pred_check
      _
    $region11: #{tpu_custom_call.1} parent=1 // pred_check_branch
      %39 = sbr.rel (0) target = $region13
    $region12: #{tpu_custom_call.1} parent=1 // pred_region
      %s41 = ssub.s32 1024, 1024
      %42 = vsyncadd [#allocation6], %s41
      %s43 = sshll.u32 [#allocation7], 4
      %s44 = int_to_ptr.vmem [resolvable:$true] %s43
      %49 = dma.hbm_to_vmem [thread:$0]  %s2, 1024, %s44, [#allocation6], 64, 64, 4
    $region13: #{tpu_custom_call.1} parent=1 // pred_fallthru
      _
    // Predicated region
    $region14: #{tpu_custom_call.1} parent=1 // pred_check
      _
    $region15: #{tpu_custom_call.1} parent=1 // pred_check_branch
      %51 = sbr.rel (0) target = $region17
    $region16: #{tpu_custom_call.1} parent=1 // pred_region
      %s53 = ssub.s32 1024, 1024
      %54 = vsyncadd [#allocation9], %s53
      %s55 = sshll.u32 [#allocation8], 4
      %s56 = int_to_ptr.vmem [resolvable:$true] %s55
      %61 = dma.hbm_to_vmem [thread:$0]  %s3, 1024, %s56, [#allocation9], 64, 64, 4
    $region17: #{tpu_custom_call.1} parent=1 // pred_fallthru
      _
    // Predicated region
    $region18: #{tpu_custom_call.1} parent=1 // pred_check
      _
    $region19: #{tpu_custom_call.1} parent=1 // pred_check_branch
      %63 = sbr.rel (0) target = $region21
    $region20: #{tpu_custom_call.1} parent=1 // pred_region
      _
    $region21: #{tpu_custom_call.1} parent=1 // pred_fallthru
      _
    // Predicated region
    $region22: #{tpu_custom_call.1} parent=1 // pred_check
      _
    $region23: #{tpu_custom_call.1} parent=1 // pred_check_branch
      %65 = sbr.rel (0) target = $region25
    $region24: #{tpu_custom_call.1} parent=1 // pred_region
      %66 = dma.done [#allocation3], 256
    $region25: #{tpu_custom_call.1} parent=1 // pred_fallthru
      _
    // Predicated region
    $region26: #{tpu_custom_call.1} parent=1 // pred_check
      _
    $region27: #{tpu_custom_call.1} parent=1 // pred_check_branch
      %68 = sbr.rel (0) target = $region29
    $region28: #{tpu_custom_call.1} parent=1 // pred_region
      %69 = dma.done [#allocation6], 256
    $region29: #{tpu_custom_call.1} parent=1 // pred_fallthru
      _
    // Predicated region
    $region30: #{tpu_custom_call.1} parent=1 // pred_check
      _
    $region31: #{tpu_custom_call.1} parent=1 // pred_check_branch
      %71 = sbr.rel (0) target = $region33
    $region32: #{tpu_custom_call.1} parent=1 // pred_region
      %72 = dma.done [#allocation6], 1024
    $region33: #{tpu_custom_call.1} parent=1 // pred_fallthru
      _
    // Predicated region
    $region34: #{tpu_custom_call.1} parent=1 // pred_check
      _
    $region35: #{tpu_custom_call.1} parent=1 // pred_check_branch
      %74 = sbr.rel (0) target = $region37
    $region36: #{tpu_custom_call.1} parent=1 // pred_region
      %75 = dma.done [#allocation9], 1024
    $region37: #{tpu_custom_call.1} parent=1 // pred_fallthru
      _
    %v77 = vld [vmem:[#allocation2] sm:$0xff]
    %v78 = vld [vmem:[#allocation2 + $0x8] sm:$0xff]
    %v79 = vpack.c.bf16 %v78, %v77
    %v80 = vld [vmem:[%s4] sm:$0x1]
    %v81 = vld [vmem:[#allocation5] sm:$0xf]
    %v82 = vld [vmem:[#allocation5 + $0x4] sm:$0xf]
    %v83 = vld [vmem:[#allocation5 + $0x8] sm:$0xf]
    %v84 = vld [vmem:[#allocation5 + $0xc] sm:$0xf]
    %v85 = vlaneseq
    %v86 = vshrl.u32 %v85, 7
    %v87 = vsub.s32 0, %v86
    %v88 = vrot.slane %v80, %v87
    %v93 = vunpack.c.l.b16 %v81
    %v94 = vunpack.c.l.b16 %v82
    %v95 = vunpack.c.l.b16 %v83
    %v96 = vunpack.c.l.b16 %v84
    %v97 = vpack.c.b16 %v94, %v93
    %v98 = vpack.c.b16 %v96, %v95
    %vm101 = vcmask 261120
    %v103 = vsel %vm101, %v79, 0
    %105 = vmatprep.subr.bf16.mxu0 0
    %106 = vmatpush1.bf16.msra.mxu0 %v97
    %107 = vmatprep.subr.bf16.mxu0 0
    %108 = vmatpush1.bf16.msra.mxu0 %v98
    %109 = vmatprep.subr.bf16.mxu0 0
    %110 = vmatpush1.bf16.msra.mxu0 0
    %111 = vmatprep.subr.bf16.mxu0 0
    %112 = vmatpush1.bf16.msra.mxu0 0
    %113 = vmatprep.subr.bf16.mxu0 0
    %114 = vmatpush1.bf16.msra.mxu0 0
    %115 = vmatprep.subr.bf16.mxu0 0
    %116 = vmatpush1.bf16.msra.mxu0 0
    %117 = vmatprep.subr.bf16.mxu0 0
    %118 = vmatpush1.bf16.msra.mxu0 0
    %119 = vmatprep.subr.bf16.mxu0 0
    %120 = vmatpush1.bf16.msra.mxu0 0
    %121 = vmatprep.subr.bf16.mxu0 0
    %122 = vmatpush1.bf16.msra.mxu0 0
    %123 = vmatprep.subr.bf16.mxu0 0
    %124 = vmatpush1.bf16.msra.mxu0 0
    %125 = vmatprep.subr.bf16.mxu0 0
    %126 = vmatpush1.bf16.msra.mxu0 0
    %127 = vmatprep.subr.bf16.mxu0 0
    %128 = vmatpush1.bf16.msra.mxu0 0
    %129 = vmatprep.subr.bf16.mxu0 0
    %130 = vmatpush1.bf16.msra.mxu0 0
    %131 = vmatprep.subr.bf16.mxu0 0
    %132 = vmatpush1.bf16.msra.mxu0 0
    %133 = vmatprep.subr.bf16.mxu0 0
    %134 = vmatpush1.bf16.msra.mxu0 0
    %135 = vmatprep.subr.bf16.mxu0 0
    %136 = vmatpush1.bf16.msra.mxu0 0
    %137 = vmatprep.mubr.bf16.mxu0 0
    %138 = vmatmul.mubr.bf16.gmra.mrb[0].mxu0 %v103
    %v139 = vpop.f32.mrb[0].mxu0
    %v140 = vadd.f32 %v88, %v139
    %v141 = vpop.f32.mrb[0].mxu0
    %v142 = vpop.f32.mrb[0].mxu0
    %v143 = vadd.f32 %v88, %v142
    %v144 = vpop.f32.mrb[0].mxu0
    %145 = vdwg.mxu0
    %v146 = vmax.f32 %v140, 0.0
    %v147 = vmax.f32 %v143, 0.0
    %v148 = vpack.c.bf16 %v147, %v146
    %v149 = vld [vmem:[%s4 + $0x1] sm:$0x1]
    %v150 = vld [vmem:[#allocation7] sm:$0xf]
    %v151 = vld [vmem:[#allocation7 + $0x4] sm:$0xf]
    %v152 = vld [vmem:[#allocation7 + $0x8] sm:$0xf]
    %v153 = vld [vmem:[#allocation7 + $0xc] sm:$0xf]
    %v154 = vld [vmem:[#allocation7 + $0x10] sm:$0xf]
    %v155 = vld [vmem:[#allocation7 + $0x14] sm:$0xf]
    %v156 = vld [vmem:[#allocation7 + $0x18] sm:$0xf]
    %v157 = vld [vmem:[#allocation7 + $0x1c] sm:$0xf]
    %v158 = vld [vmem:[#allocation7 + $0x20] sm:$0xf]
    %v159 = vld [vmem:[#allocation7 + $0x24] sm:$0xf]
    %v160 = vld [vmem:[#allocation7 + $0x28] sm:$0xf]
    %v161 = vld [vmem:[#allocation7 + $0x2c] sm:$0xf]
    %v162 = vld [vmem:[#allocation7 + $0x30] sm:$0xf]
    %v163 = vld [vmem:[#allocation7 + $0x34] sm:$0xf]
    %v164 = vld [vmem:[#allocation7 + $0x38] sm:$0xf]
    %v165 = vld [vmem:[#allocation7 + $0x3c] sm:$0xf]
    %v166 = vlaneseq
    %v167 = vshrl.u32 %v166, 7
    %v168 = vsub.s32 0, %v167
    %v169 = vrot.slane %v149, %v168
    %v186 = vunpack.c.l.b16 %v150
    %v187 = vunpack.c.l.b16 %v151
    %v188 = vunpack.c.l.b16 %v152
    %v189 = vunpack.c.l.b16 %v153
    %v190 = vunpack.c.l.b16 %v154
    %v191 = vunpack.c.l.b16 %v155
    %v192 = vunpack.c.l.b16 %v156
    %v193 = vunpack.c.l.b16 %v157
    %v194 = vunpack.c.l.b16 %v158
    %v195 = vunpack.c.l.b16 %v159
    %v196 = vunpack.c.l.b16 %v160
    %v197 = vunpack.c.l.b16 %v161
    %v198 = vunpack.c.l.b16 %v162
    %v199 = vunpack.c.l.b16 %v163
    %v200 = vunpack.c.l.b16 %v164
    %v201 = vunpack.c.l.b16 %v165
    %v202 = vpack.c.b16 %v187, %v186
    %v203 = vpack.c.b16 %v189, %v188
    %v204 = vpack.c.b16 %v191, %v190
    %v205 = vpack.c.b16 %v193, %v192
    %v206 = vpack.c.b16 %v195, %v194
    %v207 = vpack.c.b16 %v197, %v196
    %v208 = vpack.c.b16 %v199, %v198
    %v209 = vpack.c.b16 %v201, %v200
    %218 = vmatprep.subr.bf16.mxu0 0
    %219 = vmatpush1.bf16.msra.mxu0 %v202
    %220 = vmatprep.subr.bf16.mxu0 0
    %221 = vmatpush1.bf16.msra.mxu0 %v203
    %222 = vmatprep.subr.bf16.mxu0 0
    %223 = vmatpush1.bf16.msra.mxu0 %v204
    %224 = vmatprep.subr.bf16.mxu0 0
    %225 = vmatpush1.bf16.msra.mxu0 %v205
    %226 = vmatprep.subr.bf16.mxu0 0
    %227 = vmatpush1.bf16.msra.mxu0 %v206
    %228 = vmatprep.subr.bf16.mxu0 0
    %229 = vmatpush1.bf16.msra.mxu0 %v207
    %230 = vmatprep.subr.bf16.mxu0 0
    %231 = vmatpush1.bf16.msra.mxu0 %v208
    %232 = vmatprep.subr.bf16.mxu0 0
    %233 = vmatpush1.bf16.msra.mxu0 %v209
    %234 = vmatprep.subr.bf16.mxu0 0
    %235 = vmatpush1.bf16.msra.mxu0 0
    %236 = vmatprep.subr.bf16.mxu0 0
    %237 = vmatpush1.bf16.msra.mxu0 0
    %238 = vmatprep.subr.bf16.mxu0 0
    %239 = vmatpush1.bf16.msra.mxu0 0
    %240 = vmatprep.subr.bf16.mxu0 0
    %241 = vmatpush1.bf16.msra.mxu0 0
    %242 = vmatprep.subr.bf16.mxu0 0
    %243 = vmatpush1.bf16.msra.mxu0 0
    %244 = vmatprep.subr.bf16.mxu0 0
    %245 = vmatpush1.bf16.msra.mxu0 0
    %246 = vmatprep.subr.bf16.mxu0 0
    %247 = vmatpush1.bf16.msra.mxu0 0
    %248 = vmatprep.subr.bf16.mxu0 0
    %249 = vmatpush1.bf16.msra.mxu0 0
    %250 = vmatprep.mubr.bf16.mxu0 0
    %251 = vmatmul.mubr.bf16.gmra.mrb[0].mxu0 %v148
    %v252 = vpop.f32.mrb[0].mxu0
    %v253 = vadd.f32 %v169, %v252
    %v254 = vpop.f32.mrb[0].mxu0
    %v255 = vpop.f32.mrb[0].mxu0
    %v256 = vadd.f32 %v169, %v255
    %v257 = vpop.f32.mrb[0].mxu0
    %258 = vdwg.mxu0
    %v259 = vmax.f32 %v253, 0.0
    %v260 = vmax.f32 %v256, 0.0
    %v261 = vpack.c.bf16 %v260, %v259
    %v262 = vld [vmem:[%s4 + $0x2] sm:$0x1]
    %v263 = vld [vmem:[#allocation8] sm:$0xf]
    %v264 = vld [vmem:[#allocation8 + $0x4] sm:$0xf]
    %v265 = vld [vmem:[#allocation8 + $0x8] sm:$0xf]
    %v266 = vld [vmem:[#allocation8 + $0xc] sm:$0xf]
    %v267 = vld [vmem:[#allocation8 + $0x10] sm:$0xf]
    %v268 = vld [vmem:[#allocation8 + $0x14] sm:$0xf]
    %v269 = vld [vmem:[#allocation8 + $0x18] sm:$0xf]
    %v270 = vld [vmem:[#allocation8 + $0x1c] sm:$0xf]
    %v271 = vld [vmem:[#allocation8 + $0x20] sm:$0xf]
    %v272 = vld [vmem:[#allocation8 + $0x24] sm:$0xf]
    %v273 = vld [vmem:[#allocation8 + $0x28] sm:$0xf]
    %v274 = vld [vmem:[#allocation8 + $0x2c] sm:$0xf]
    %v275 = vld [vmem:[#allocation8 + $0x30] sm:$0xf]
    %v276 = vld [vmem:[#allocation8 + $0x34] sm:$0xf]
    %v277 = vld [vmem:[#allocation8 + $0x38] sm:$0xf]
    %v278 = vld [vmem:[#allocation8 + $0x3c] sm:$0xf]
    %v279 = vlaneseq
    %v280 = vshrl.u32 %v279, 7
    %v281 = vsub.s32 0, %v280
    %v282 = vrot.slane %v262, %v281
    %v299 = vunpack.c.l.b16 %v263
    %v300 = vunpack.c.l.b16 %v264
    %v301 = vunpack.c.l.b16 %v265
    %v302 = vunpack.c.l.b16 %v266
    %v303 = vunpack.c.l.b16 %v267
    %v304 = vunpack.c.l.b16 %v268
    %v305 = vunpack.c.l.b16 %v269
    %v306 = vunpack.c.l.b16 %v270
    %v307 = vunpack.c.l.b16 %v271
    %v308 = vunpack.c.l.b16 %v272
    %v309 = vunpack.c.l.b16 %v273
    %v310 = vunpack.c.l.b16 %v274
    %v311 = vunpack.c.l.b16 %v275
    %v312 = vunpack.c.l.b16 %v276
    %v313 = vunpack.c.l.b16 %v277
    %v314 = vunpack.c.l.b16 %v278
    %v315 = vpack.c.b16 %v300, %v299
    %v316 = vpack.c.b16 %v302, %v301
    %v317 = vpack.c.b16 %v304, %v303
    %v318 = vpack.c.b16 %v306, %v305
    %v319 = vpack.c.b16 %v308, %v307
    %v320 = vpack.c.b16 %v310, %v309
    %v321 = vpack.c.b16 %v312, %v311
    %v322 = vpack.c.b16 %v314, %v313
    %331 = vmatprep.subr.bf16.mxu0 0
    %332 = vmatpush1.bf16.msra.mxu0 %v315
    %333 = vmatprep.subr.bf16.mxu0 0
    %334 = vmatpush1.bf16.msra.mxu0 %v316
    %335 = vmatprep.subr.bf16.mxu0 0
    %336 = vmatpush1.bf16.msra.mxu0 %v317
    %337 = vmatprep.subr.bf16.mxu0 0
    %338 = vmatpush1.bf16.msra.mxu0 %v318
    %339 = vmatprep.subr.bf16.mxu0 0
    %340 = vmatpush1.bf16.msra.mxu0 %v319
    %341 = vmatprep.subr.bf16.mxu0 0
    %342 = vmatpush1.bf16.msra.mxu0 %v320
    %343 = vmatprep.subr.bf16.mxu0 0
    %344 = vmatpush1.bf16.msra.mxu0 %v321
    %345 = vmatprep.subr.bf16.mxu0 0
    %346 = vmatpush1.bf16.msra.mxu0 %v322
    %347 = vmatprep.subr.bf16.mxu0 0
    %348 = vmatpush1.bf16.msra.mxu0 0
    %349 = vmatprep.subr.bf16.mxu0 0
    %350 = vmatpush1.bf16.msra.mxu0 0
    %351 = vmatprep.subr.bf16.mxu0 0
    %352 = vmatpush1.bf16.msra.mxu0 0
    %353 = vmatprep.subr.bf16.mxu0 0
    %354 = vmatpush1.bf16.msra.mxu0 0
    %355 = vmatprep.subr.bf16.mxu0 0
    %356 = vmatpush1.bf16.msra.mxu0 0
    %357 = vmatprep.subr.bf16.mxu0 0
    %358 = vmatpush1.bf16.msra.mxu0 0
    %359 = vmatprep.subr.bf16.mxu0 0
    %360 = vmatpush1.bf16.msra.mxu0 0
    %361 = vmatprep.subr.bf16.mxu0 0
    %362 = vmatpush1.bf16.msra.mxu0 0
    %363 = vmatprep.mubr.bf16.mxu0 0
    %364 = vmatmul.mubr.bf16.gmra.mrb[0].mxu0 %v261
    %v365 = vpop.f32.mrb[0].mxu0
    %v366 = vadd.f32 %v282, %v365
    %v367 = vpop.f32.mrb[0].mxu0
    %v368 = vpop.f32.mrb[0].mxu0
    %v369 = vadd.f32 %v282, %v368
    %v370 = vpop.f32.mrb[0].mxu0
    %371 = vdwg.mxu0
    %v372 = vlaneseq
    %v373 = vand.u32 %v372, 127
    %vm374 = vcmp.lt.s32.totalorder %v373, 8
    %v375 = vtanh.pop %v366
    %v376 = vtanh.pop %v369
    %v377 = vsel %vm374, 1, 0
    %vm378 = vcmp.eq.s32.totalorder %v377, 1
    %v379 = vsel %vm378, 0.0, %v366
    %v380 = vsel %vm378, 0.0, %v369
    %v381 = vmul.f32 %v379, 1.442695
    %v382 = vpow.pop %v381
    %v383 = vmul.f32 %v380, 1.442695
    %v384 = vpow.pop %v383
    %v385 = vsel %vm378, %v375, %v382
    %v386 = vsel %vm378, %v376, %v384
    %v387 = vpack.c.bf16 %v386, %v385
    %v389 = vunpack.c.l.b16 %v387
    %v390 = vunpack.c.h.b16 %v387
    %v391 = vpack.c.b16 %v389, %v389
    %v392 = vpack.c.b16 %v390, %v390
    %395 = vst [vmem:[#allocation10] sm:$0xf] %v391
    %396 = vst [vmem:[#allocation10 + $0x4] sm:$0xf] %v392
    // Predicated region
    $region38: #{tpu_custom_call.1} parent=1 // pred_check
      _
    $region39: #{tpu_custom_call.1} parent=1 // pred_check_branch
      %398 = sbr.rel (0) target = $region41
    $region40: #{tpu_custom_call.1} parent=1 // pred_region
      %s400 = ssub.s32 128, 128
      %401 = vsyncadd [#allocation4], %s400
      %s402 = sshll.u32 [#allocation10], 4
      %s403 = int_to_ptr.vmem [resolvable:$true] %s402
      %408 = dma.vmem_to_hbm [thread:$0]  %s403, 128, %s5, [#allocation4], 64, 64, 4
    $region41: #{tpu_custom_call.1} parent=1 // pred_fallthru
      _
    // Predicated region
    $region42: #{tpu_custom_call.1} parent=1 // pred_check
      _
    $region43: #{tpu_custom_call.1} parent=1 // pred_check_branch
      %410 = sbr.rel (0) target = $region45
    $region44: #{tpu_custom_call.1} parent=1 // pred_region
      %411 = dma.done [#allocation4], 128
    $region45: #{tpu_custom_call.1} parent=1 // pred_fallthru
      _
    %412 = vsyncpa [#allocation3], 1
    %413 = vsyncpa [#allocation6], 1
    %414 = vsyncpa [#allocation9], 1
    %415 = vsyncpa [#allocation4], 1

</llo_original>
